<compile_context>
chip_gen: v7x
topology: tpu7x:2x2x1
jax: 0.10.0
libtpu: 0.0.40
codegen_flags: <defaults>
</compile_context>

<pallas_src>
import functools

import jax
import jax.numpy as jnp
from jax import lax
from jax.experimental import pallas as pl
from jax.experimental.pallas import tpu as pltpu


def _round_up(x, m):
    return (x + m - 1) // m * m


def _miou_partials_kernel(x_ref, t_ref, inter_ref, union_ref, *, hw):
    # x_ref:     (C, S, 128) logits tile (native dtype; cast to f32 here)
    # t_ref:     (S, 128)    integer labels tile (native narrow dtype)
    # inter_ref: (C, 128)    f32 lane-dense accumulator (resident across axis 1)
    # union_ref: (C, 128)    f32 lane-dense accumulator (resident across axis 1)
    c, s_blk, lanes = x_ref.shape
    k = pl.program_id(1)

    @pl.when(k == 0)
    def _init():
        inter_ref[...] = jnp.zeros_like(inter_ref)
        union_ref[...] = jnp.zeros_like(union_ref)

    x = x_ref[...].astype(jnp.float32)                 # (C, S, 128)
    t = t_ref[...].astype(jnp.int32)                   # (S, 128)

    # Numerically stable softmax over the class (leading, non-vreg) axis:
    # cross-vreg VPU max/add + one EUP exp; single exact reciprocal of the
    # (1, S, 128) denominator (parity with the reference divide).
    m = jnp.max(x, axis=0, keepdims=True)              # (1, S, 128)
    e = jnp.exp(x - m)                                  # (C, S, 128)
    denom = jnp.sum(e, axis=0, keepdims=True)           # (1, S, 128)
    p = e * pl.reciprocal(denom, approx=False)           # (C, S, 128)

    # Validity of each spatial position: masks the ragged tail of the last
    # spatial tile AND the 128-lane pad tail.  Applied to both p and hit so
    # out-of-bounds garbage labels can never contribute.
    s_iota = lax.broadcasted_iota(jnp.int32, (s_blk, lanes), 0)
    l_iota = lax.broadcasted_iota(jnp.int32, (s_blk, lanes), 1)
    pos = (k * s_blk + s_iota) * lanes + l_iota
    valid = pos < hw                                    # (S, 128) bool

    # One-hot membership as a boolean compare (no f32 one-hot tensor).
    cls = lax.broadcasted_iota(jnp.int32, (c, s_blk, lanes), 0)
    hit = (t[None] == cls) & valid[None]                # (C, S, 128) bool
    p_valid = jnp.where(valid[None], p, 0.0)            # padded pixels -> 0

    # inter = p * onehot ;  union = p + onehot - p*onehot = where(onehot, 1, p)
    inter_elem = jnp.where(hit, p, 0.0)
    union_elem = jnp.where(hit, 1.0, p_valid)

    # Lane-dense partial sums; only the sublane axis is reduced per tile.
    inter_ref[...] += jnp.sum(inter_elem, axis=1)        # (C, 128)
    union_ref[...] += jnp.sum(union_elem, axis=1)        # (C, 128)


def miou_loss(inputs, target, weights, *, target_block_bytes=None,
              vmem_limit_bytes=None):
    """inputs: (N, C, H, W) logits (f32 or bf16); target: (N, H, W) int labels
    (int8/uint8/int32 streamed natively); weights: (C,). Returns scalar f32."""
    N, C, H, W = inputs.shape
    HW = H * W
    LANES = 128

    # ---- VMEM budgets (v5e/v6e: 128 MiB physical, v7x: 64 MiB) --------------
    if target_block_bytes is None or vmem_limit_bytes is None:
        try:
            cap = int(pltpu.get_tpu_info().vmem_capacity_bytes)
        except Exception:
            cap = 64 * 1024 * 1024
        if vmem_limit_bytes is None:
            vmem_limit_bytes = (cap * 3) // 4
        if target_block_bytes is None:
            # f32-equivalent bytes of one logits block: leaves headroom for the
            # double-buffered input blocks plus the in-kernel f32 temporaries.
            target_block_bytes = cap // 16

    # ---- Lane-dense (N, C, S, 128) view; native dtypes, no upcast -----------
    hw_pad = _round_up(HW, LANES)
    s_total = hw_pad // LANES

    x = inputs.reshape(N, C, HW)                        # free view
    if target.dtype not in (jnp.int8, jnp.uint8, jnp.int32):
        target = target.astype(jnp.int32)
    t = target.reshape(N, HW)                           # free view
    if hw_pad != HW:
        # TODO(synk): the ragged HW % 128 tail copies the logits once via pad;
        # the aligned case (typical segmentation shapes) streams them untouched.
        x = jnp.pad(x, ((0, 0), (0, 0), (0, hw_pad - HW)))
        t = jnp.pad(t, ((0, 0), (0, hw_pad - HW)))
    x = x.reshape(N, C, s_total, LANES)
    t = t.reshape(N, s_total, LANES)

    # ---- Spatial tile size from the byte budget (multiple of 32 sublanes) ---
    s_blk = max(int(target_block_bytes) // (C * LANES * 4), 32)
    s_blk = max((s_blk // 32) * 32, 32)
    if s_blk >= s_total:
        s_blk = s_total                                  # single full-extent tile
    num_tiles = pl.cdiv(s_total, s_blk)

    kernel = functools.partial(_miou_partials_kernel, hw=HW)

    inter, union = pl.pallas_call(
        kernel,
        out_shape=(
            jax.ShapeDtypeStruct((N, C, LANES), jnp.float32),
            jax.ShapeDtypeStruct((N, C, LANES), jnp.float32),
        ),
        grid_spec=pltpu.PrefetchScalarGridSpec(
            num_scalar_prefetch=0,
            grid=(N, num_tiles),
            in_specs=[
                pl.BlockSpec((None, C, s_blk, LANES), lambda n, k: (n, 0, k, 0)),
                pl.BlockSpec((None, s_blk, LANES), lambda n, k: (n, k, 0)),
            ],
            out_specs=[
                pl.BlockSpec((None, C, LANES), lambda n, k: (n, 0, 0)),
                pl.BlockSpec((None, C, LANES), lambda n, k: (n, 0, 0)),
            ],
        ),
        compiler_params=pltpu.CompilerParams(
            dimension_semantics=("parallel", "arbitrary"),
            vmem_limit_bytes=int(vmem_limit_bytes),
        ),
    )(x, t)

    # ---- Tiny (N, C, 128) -> scalar finalize in plain JAX -------------------
    inter = jnp.sum(inter, axis=-1)                     # (N, C)
    union = jnp.sum(union, axis=-1)                     # (N, C)
    w = weights.astype(jnp.float32).reshape(1, C)
    return -jnp.mean(w * inter / (union + 1e-8))


def _miou_loss_ref(inputs, target, weights):
    """Pure-JAX reference mirroring the PyTorch forward."""
    N, C, H, W = inputs.shape
    p = jax.nn.softmax(inputs.astype(jnp.float32), axis=1)
    oneh = jax.nn.one_hot(target.astype(jnp.int32), C, axis=1,
                          dtype=jnp.float32)            # (N, C, H, W)
    inter = (p * oneh).reshape(N, C, -1).sum(2)
    union = (p + oneh - p * oneh).reshape(N, C, -1).sum(2)
    loss = weights.astype(jnp.float32) * inter / (union + 1e-8)
    return -jnp.mean(loss)


if __name__ == "__main__":
    key = jax.random.PRNGKey(0)
    k1, k2, k3, k4 = jax.random.split(key, 4)

    # Test 1: small standard shape, HW % 128 == 0 (free-view reshape, one tile).
    N, C, H, W = 2, 4, 16, 16
    inputs = jax.random.normal(k1, (N, C, H, W), dtype=jnp.float32)
    target = jax.random.randint(k2, (N, H, W), 0, C, dtype=jnp.int32)
    weights = jnp.arange(1, C + 1, dtype=jnp.float32) / C

    loss = miou_loss(inputs, target, weights)
    jax.block_until_ready(loss)
    ref = _miou_loss_ref(inputs, target, weights)
    assert jnp.allclose(loss, ref, atol=1e-5, rtol=1e-5), (loss, ref)

    # Test 2: bf16 logits streamed natively (cast to f32 inside the kernel).
    inputs_bf16 = inputs.astype(jnp.bfloat16)
    loss_bf = miou_loss(inputs_bf16, target, weights)
    jax.block_until_ready(loss_bf)
    ref_bf = _miou_loss_ref(inputs_bf16, target, weights)
    assert jnp.allclose(loss_bf, ref_bf, atol=1e-5, rtol=1e-5), (loss_bf, ref_bf)

    # Test 3: ragged HW (not a multiple of 128), int8 labels, and a tiny forced
    # block size so multiple spatial tiles (with a partially OOB tail tile)
    # exercise the accumulation + masking path.
    H2, W2 = 72, 72      # HW = 5184 -> 41 sublane rows after 128-lane packing
    inputs2 = jax.random.normal(k3, (N, C, H2, W2), dtype=jnp.float32)
    target2 = jax.random.randint(k4, (N, H2, W2), 0, C, dtype=jnp.int32)
    target2_i8 = target2.astype(jnp.int8)

    loss2 = miou_loss(inputs2, target2_i8, weights, target_block_bytes=1)
    jax.block_until_ready(loss2)
    ref2 = _miou_loss_ref(inputs2, target2, weights)
    assert jnp.allclose(loss2, ref2, atol=1e-5, rtol=1e-5), (loss2, ref2)

    print("KERNEL_OK")
</pallas_src>

<mosaic_0001>
module attributes {stable_mosaic.version = 11 : i64} {
  func.func @_miou_partials_kernel(%arg0: i32, %arg1: i32, %arg2: memref<1x4x2x128xf32, #tpu.memory_space<vmem>>, %arg3: memref<1x2x128xi32, #tpu.memory_space<vmem>>, %arg4: memref<1x4x128xf32, #tpu.memory_space<vmem>>, %arg5: memref<1x4x128xf32, #tpu.memory_space<vmem>>) attributes {dimension_semantics = [#tpu.dimension_semantics<parallel>, #tpu.dimension_semantics<arbitrary>], iteration_bounds = array<i64: 2, 1>, scalar_prefetch = 0 : i64, scratch_operands = 0 : i64, tpu.core_type = #tpu.core_type<tc>, window_params = [{transform_indices = @transform_0, window_bounds = array<i64: 1, 4, 2, 128>}, {transform_indices = @transform_1, window_bounds = array<i64: 1, 2, 128>}, {transform_indices = @transform_2, window_bounds = array<i64: 1, 4, 128>}, {transform_indices = @transform_3, window_bounds = array<i64: 1, 4, 128>}]} {
    %c0_i32 = arith.constant 0 : i32
    %0 = arith.cmpi eq, %arg1, %c0_i32 : i32
    %1 = arith.extui %0 : i1 to i32
    %c0_i32_0 = arith.constant 0 : i32
    %2 = arith.cmpi ne, %1, %c0_i32_0 : i32
    scf.if %2 {
      %cst_25 = arith.constant 0.000000e+00 : f32
      %57 = vector.broadcast %cst_25 : f32 to vector<4x128xf32>
      %c0_26 = arith.constant 0 : index
      %c0_27 = arith.constant 0 : index
      %c0_28 = arith.constant 0 : index
      %58 = vector.load %arg4[%c0_26, %c0_27, %c0_28] : memref<1x4x128xf32, #tpu.memory_space<vmem>>, vector<1x4x128xf32>
      %59 = vector.shape_cast %58 : vector<1x4x128xf32> to vector<4x128xf32>
      %60 = vector.shape_cast %57 : vector<4x128xf32> to vector<1x4x128xf32>
      tpu.vector_store %arg4[%c0_26, %c0_27, %c0_28], %60 {strides = array<i32>} : memref<1x4x128xf32, #tpu.memory_space<vmem>>, vector<1x4x128xf32>,
      %cst_29 = arith.constant 0.000000e+00 : f32
      %61 = vector.broadcast %cst_29 : f32 to vector<4x128xf32>
      %c0_30 = arith.constant 0 : index
      %c0_31 = arith.constant 0 : index
      %c0_32 = arith.constant 0 : index
      %62 = vector.load %arg5[%c0_30, %c0_31, %c0_32] : memref<1x4x128xf32, #tpu.memory_space<vmem>>, vector<1x4x128xf32>
      %63 = vector.shape_cast %62 : vector<1x4x128xf32> to vector<4x128xf32>
      %64 = vector.shape_cast %61 : vector<4x128xf32> to vector<1x4x128xf32>
      tpu.vector_store %arg5[%c0_30, %c0_31, %c0_32], %64 {strides = array<i32>} : memref<1x4x128xf32, #tpu.memory_space<vmem>>, vector<1x4x128xf32>,
    } else {
    }
    %c0 = arith.constant 0 : index
    %c0_1 = arith.constant 0 : index
    %c0_2 = arith.constant 0 : index
    %c0_3 = arith.constant 0 : index
    %3 = vector.load %arg2[%c0, %c0_1, %c0_2, %c0_3] : memref<1x4x2x128xf32, #tpu.memory_space<vmem>>, vector<1x4x2x128xf32>
    %4 = vector.shape_cast %3 : vector<1x4x2x128xf32> to vector<4x2x128xf32>
    %c0_4 = arith.constant 0 : index
    %c0_5 = arith.constant 0 : index
    %c0_6 = arith.constant 0 : index
    %5 = vector.load %arg3[%c0_4, %c0_5, %c0_6] : memref<1x2x128xi32, #tpu.memory_space<vmem>>, vector<1x2x128xi32>
    %6 = vector.shape_cast %5 : vector<1x2x128xi32> to vector<2x128xi32>
    %cst = arith.constant dense<0xFF800000> : vector<2x128xf32>
    %7 = vector.multi_reduction <maximumf>, %4, %cst [0] : vector<4x2x128xf32> to vector<2x128xf32>
    %8 = vector.shape_cast %7 : vector<2x128xf32> to vector<1x2x128xf32>
    %9 = vector.broadcast %8 : vector<1x2x128xf32> to vector<4x2x128xf32>
    %10 = arith.subf %4, %9 : vector<4x2x128xf32>
    %11 = math.exp %10 : vector<4x2x128xf32>
    %cst_7 = arith.constant dense<0.000000e+00> : vector<2x128xf32>
    %12 = vector.multi_reduction <add>, %11, %cst_7 [0] : vector<4x2x128xf32> to vector<2x128xf32>
    %13 = vector.shape_cast %12 : vector<2x128xf32> to vector<1x2x128xf32>
    %14 = tpu.reciprocal %13 : vector<1x2x128xf32> -> vector<1x2x128xf32>
    %15 = vector.broadcast %14 : vector<1x2x128xf32> to vector<4x2x128xf32>
    %16 = arith.mulf %11, %15 : vector<4x2x128xf32>
    %17 = tpu.iota {dimensions = array<i32: 0>} : vector<2x128xi32>
    %18 = tpu.iota {dimensions = array<i32: 1>} : vector<2x128xi32>
    %c2_i32 = arith.constant 2 : i32
    %19 = arith.muli %arg1, %c2_i32 : i32
    %20 = vector.broadcast %19 : i32 to vector<2x128xi32>
    %21 = arith.addi %20, %17 : vector<2x128xi32>
    %c128_i32 = arith.constant 128 : i32
    %22 = vector.broadcast %c128_i32 : i32 to vector<2x128xi32>
    %23 = arith.muli %21, %22 : vector<2x128xi32>
    %24 = arith.addi %23, %18 : vector<2x128xi32>
    %c256_i32 = arith.constant 256 : i32
    %25 = vector.broadcast %c256_i32 : i32 to vector<2x128xi32>
    %26 = arith.cmpi slt, %24, %25 : vector<2x128xi32>
    %27 = tpu.iota {dimensions = array<i32: 0>} : vector<4x2x128xi32>
    %28 = vector.shape_cast %6 : vector<2x128xi32> to vector<1x2x128xi32>
    %29 = vector.broadcast %28 : vector<1x2x128xi32> to vector<4x2x128xi32>
    %30 = arith.cmpi eq, %29, %27 : vector<4x2x128xi32>
    %31 = vector.shape_cast %26 : vector<2x128xi1> to vector<1x2x128xi1>
    %32 = vector.broadcast %31 : vector<1x2x128xi1> to vector<4x2x128xi1>
    %33 = arith.andi %30, %32 : vector<4x2x128xi1>
    %34 = vector.shape_cast %26 : vector<2x128xi1> to vector<1x2x128xi1>
    %cst_8 = arith.constant 0.000000e+00 : f32
    %35 = vector.shape_cast %34 : vector<1x2x128xi1> to vector<1x2x128xi1>
    %36 = vector.broadcast %35 : vector<1x2x128xi1> to vector<4x2x128xi1>
    %37 = vector.broadcast %cst_8 : f32 to vector<4x2x128xf32>
    %38 = arith.select %36, %16, %37 : vector<4x2x128xi1>, vector<4x2x128xf32>
    %cst_9 = arith.constant 0.000000e+00 : f32
    %39 = vector.broadcast %cst_9 : f32 to vector<4x2x128xf32>
    %40 = arith.select %33, %16, %39 : vector<4x2x128xi1>, vector<4x2x128xf32>
    %cst_10 = arith.constant 1.000000e+00 : f32
    %41 = vector.broadcast %cst_10 : f32 to vector<4x2x128xf32>
    %42 = arith.select %33, %41, %38 : vector<4x2x128xi1>, vector<4x2x128xf32>
    %c0_11 = arith.constant 0 : index
    %c0_12 = arith.constant 0 : index
    %c0_13 = arith.constant 0 : index
    %43 = vector.load %arg4[%c0_11, %c0_12, %c0_13] : memref<1x4x128xf32, #tpu.memory_space<vmem>>, vector<1x4x128xf32>
    %44 = vector.shape_cast %43 : vector<1x4x128xf32> to vector<4x128xf32>
    %cst_14 = arith.constant dense<0.000000e+00> : vector<4x128xf32>
    %45 = vector.multi_reduction <add>, %40, %cst_14 [1] : vector<4x2x128xf32> to vector<4x128xf32>
    %46 = arith.addf %44, %45 : vector<4x128xf32>
    %c0_15 = arith.constant 0 : index
    %c0_16 = arith.constant 0 : index
    %c0_17 = arith.constant 0 : index
    %47 = vector.load %arg4[%c0_15, %c0_16, %c0_17] : memref<1x4x128xf32, #tpu.memory_space<vmem>>, vector<1x4x128xf32>
    %48 = vector.shape_cast %47 : vector<1x4x128xf32> to vector<4x128xf32>
    %49 = vector.shape_cast %46 : vector<4x128xf32> to vector<1x4x128xf32>
    tpu.vector_store %arg4[%c0_15, %c0_16, %c0_17], %49 {strides = array<i32>} : memref<1x4x128xf32, #tpu.memory_space<vmem>>, vector<1x4x128xf32>,
    %c0_18 = arith.constant 0 : index
    %c0_19 = arith.constant 0 : index
    %c0_20 = arith.constant 0 : index
    %50 = vector.load %arg5[%c0_18, %c0_19, %c0_20] : memref<1x4x128xf32, #tpu.memory_space<vmem>>, vector<1x4x128xf32>
    %51 = vector.shape_cast %50 : vector<1x4x128xf32> to vector<4x128xf32>
    %cst_21 = arith.constant dense<0.000000e+00> : vector<4x128xf32>
    %52 = vector.multi_reduction <add>, %42, %cst_21 [1] : vector<4x2x128xf32> to vector<4x128xf32>
    %53 = arith.addf %51, %52 : vector<4x128xf32>
    %c0_22 = arith.constant 0 : index
    %c0_23 = arith.constant 0 : index
    %c0_24 = arith.constant 0 : index
    %54 = vector.load %arg5[%c0_22, %c0_23, %c0_24] : memref<1x4x128xf32, #tpu.memory_space<vmem>>, vector<1x4x128xf32>
    %55 = vector.shape_cast %54 : vector<1x4x128xf32> to vector<4x128xf32>
    %56 = vector.shape_cast %53 : vector<4x128xf32> to vector<1x4x128xf32>
    tpu.vector_store %arg5[%c0_22, %c0_23, %c0_24], %56 {strides = array<i32>} : memref<1x4x128xf32, #tpu.memory_space<vmem>>, vector<1x4x128xf32>,
    return
  }
  func.func @transform_0(%arg0: i32, %arg1: i32) -> (i32, i32, i32, i32) {
    %c0_i32 = arith.constant 0 : i32
    %c0_i32_0 = arith.constant 0 : i32
    %c0_i32_1 = arith.constant 0 : i32
    return %arg0, %c0_i32, %arg1, %c0_i32_0 : i32, i32, i32, i32
  }
  func.func @transform_1(%arg0: i32, %arg1: i32) -> (i32, i32, i32) {
    %c0_i32 = arith.constant 0 : i32
    %c0_i32_0 = arith.constant 0 : i32
    return %arg0, %arg1, %c0_i32 : i32, i32, i32
  }
  func.func @transform_2(%arg0: i32, %arg1: i32) -> (i32, i32, i32) {
    %c0_i32 = arith.constant 0 : i32
    %c0_i32_0 = arith.constant 0 : i32
    %c0_i32_1 = arith.constant 0 : i32
    return %arg0, %c0_i32, %c0_i32_0 : i32, i32, i32
  }
  func.func @transform_3(%arg0: i32, %arg1: i32) -> (i32, i32, i32) {
    %c0_i32 = arith.constant 0 : i32
    %c0_i32_0 = arith.constant 0 : i32
    %c0_i32_1 = arith.constant 0 : i32
    return %arg0, %c0_i32, %c0_i32_0 : i32, i32, i32
  }
}

</mosaic_0001>

<llo_original>
// kernel: tpu_custom_call.1
$region0: #{tpu_custom_call.1}
  #allocation0 [shape = 'u32[]', space=smem, size = 0x4, offset = 0x4, fixed_abs, tag = 'smem constant byte address 0x4 - core index']
  #allocation1 [shape = 'u32[144,128]{1,0:T(1,128)}', space=vmem, size = 0x12000, scoped, tag = 'internal scratch']
  %s0 = inlined_call_operand.hbm [shape: f32[2,4,2,128], index: 0, kind: input, shape index: {}]
  %s1 = inlined_call_operand.hbm [shape: s32[2,2,128], index: 1, kind: input, shape index: {}]
  %s2 = inlined_call_operand.hbm [shape: f32[2,4,128], index: 2, kind: output, shape index: {0}]
  %s3 = inlined_call_operand.hbm [shape: f32[2,4,128], index: 3, kind: output, shape index: {1}]
  %4 = xla_tuple %s2, %s3
  %s5 = sld [smem:[#allocation0]]
  $region61: #{tpu_custom_call.1} parent=0
    _
  %s7 = ssub.s32 1, %s5
  %s8 = scalar_select 0, %s7, %s5
  $region1: #{tpu_custom_call.1} parent=0
    #allocation2 [shape = 'u8[8192]{0}', space=vmem, size = 0x2000, scoped, tag = 'input window, operand 0']
    #allocation3 [shape = 's32[2]{0}', space=sflag, size = 0x8, scoped, tag = 'scoped memory for tpu_custom_call.1']
    #allocation4 [shape = 's32[2]{0}', space=sflag, size = 0x8, scoped, tag = 'scoped memory for tpu_custom_call.1']
    #allocation5 [shape = 'u8[2048]{0}', space=vmem, size = 0x800, scoped, tag = 'input window, operand 1']
    #allocation6 [shape = 's32[2]{0}', space=sflag, size = 0x8, scoped, tag = 'scoped memory for tpu_custom_call.1']
    #allocation7 [shape = 'u8[4096]{0}', space=vmem, size = 0x1000, scoped, tag = 'output window, operand 0']
    #allocation8 [shape = 'u8[4096]{0}', space=vmem, size = 0x1000, scoped, tag = 'output window, operand 1']
    #allocation9 [shape = 's32[2]{0}', space=sflag, size = 0x8, scoped, tag = 'scoped memory for tpu_custom_call.1']
    %9 = vsyncpa [#allocation3], 0
    %s10 = scalar_lea.sflag [#allocation3], 1
    %11 = vsyncpa %s10, 0
    %12 = vsyncpa [#allocation6], 0
    %s13 = scalar_lea.sflag [#allocation6], 1
    %14 = vsyncpa %s13, 0
    %15 = vsyncpa [#allocation4], 0
    %s16 = scalar_lea.sflag [#allocation4], 1
    %17 = vsyncpa %s16, 0
    %18 = vsyncpa [#allocation9], 0
    %s19 = scalar_lea.sflag [#allocation9], 1
    %20 = vsyncpa %s19, 0
    loop: start=0, step=1, limit=4
    $region2: #{tpu_custom_call.1} parent=1 // loop_pre_header
      _
    $region3: #{tpu_custom_call.1} parent=1 // loop_header
      %s22 = sphi 0, %s26
      %p23 = scmp.ge.s32.totalorder %s22, 4
      %s29 = sphi 0, %s41
      %s30 = sphi 0, %s37
      %s31 = sphi 0, %s29
      %s32 = sphi 0, %s30
      %s33 = sphi 0, %s31
      %s34 = sphi 0, %s32
      %s46 = sphi 0, %s48
      %s49 = sphi 0, %s46
      %s50 = sphi 0, %s49
      %s66 = sphi 0, %s50
      %s74 = sphi 0, %s76
      %s77 = sphi 0, %s74
      %s78 = sphi 0, %s77
      %s94 = sphi 0, %s78
      %s100 = sphi 0, %s102
      %s103 = sphi 0, %s100
      %s104 = sphi 0, %s103
      %s120 = sphi 0, %s104
      %s126 = sphi 0, %s128
      %s129 = sphi 0, %s126
      %s130 = sphi 0, %s129
      %s146 = sphi 0, %s130
    $region4: #{tpu_custom_call.1} parent=1 // loop_header_branch
      %25 = sbr.rel (%p23) target = $region8
    $region5: #{tpu_custom_call.1} parent=1 // loop_body
      %s27 = ssub.s32 %s22, 1
      %s28 = ssub.s32 %s22, 2
      %s35 = sadd.s32 1, %s30
      %p36 = scmp.ge.s32.totalorder %s35, 1
      %s37 = scalar_select %p36, 0, %s35
      %s38 = sadd.s32 1, %s29
      %s39 = scalar_select %p36, %s38, %s29
      %p40 = scmp.ge.s32.totalorder %s39, 2
      %s41 = scalar_select %p40, 0, %s39
      %s42 = ssub.s32 %s29, %s41
      %s43 = ssub.s32 %s30, %s37
      %s44 = sor.u32 %s42, %s43
      %p45 = scmp.eq.s32.totalorder %s44, 0
      %s47 = sadd.s32 %s46, 1
      %s48 = scalar_select %p45, %s46, %s47
      %p51 = pneg %p45
      %p52 = scmp.eq.s32.totalorder %s22, 1
      %p53 = por %p51, %p52
      %p54 = scmp.ne.s32.totalorder %s46, %s49
      %p55 = scmp.eq.s32.totalorder %s22, 0
      %p56 = por %p54, %p55
      %p57 = scmp.ne.s32.totalorder %s46, %s49
      %p58 = scmp.eq.s32.totalorder %s27, 1
      %p59 = por %p57, %p58
      %p60 = scmp.ne.s32.totalorder %s49, %s50
      %p61 = scmp.eq.s32.totalorder %s27, 0
      %p62 = por %p60, %p61
      %p63 = scmp.ne.s32.totalorder %s49, %s50
      %p64 = scmp.eq.s32.totalorder %s28, 1
      %p65 = por %p63, %p64
      %p67 = scmp.ne.s32.totalorder %s50, %s66
      %p68 = scmp.eq.s32.totalorder %s28, 0
      %p69 = por %p67, %p68
      %s70 = ssub.s32 %s29, %s41
      %s71 = ssub.s32 %s30, %s37
      %s72 = sor.u32 %s70, %s71
      %p73 = scmp.eq.s32.totalorder %s72, 0
      %s75 = sadd.s32 %s74, 1
      %s76 = scalar_select %p73, %s74, %s75
      %p79 = pneg %p73
      %p80 = scmp.eq.s32.totalorder %s22, 1
      %p81 = por %p79, %p80
      %p82 = scmp.ne.s32.totalorder %s74, %s77
      %p83 = scmp.eq.s32.totalorder %s22, 0
      %p84 = por %p82, %p83
      %p85 = scmp.ne.s32.totalorder %s74, %s77
      %p86 = scmp.eq.s32.totalorder %s27, 1
      %p87 = por %p85, %p86
      %p88 = scmp.ne.s32.totalorder %s77, %s78
      %p89 = scmp.eq.s32.totalorder %s27, 0
      %p90 = por %p88, %p89
      %p91 = scmp.ne.s32.totalorder %s77, %s78
      %p92 = scmp.eq.s32.totalorder %s28, 1
      %p93 = por %p91, %p92
      %p95 = scmp.ne.s32.totalorder %s78, %s94
      %p96 = scmp.eq.s32.totalorder %s28, 0
      %p97 = por %p95, %p96
      %s98 = ssub.s32 %s29, %s41
      %p99 = scmp.eq.s32.totalorder %s98, 0
      %s101 = sadd.s32 %s100, 1
      %s102 = scalar_select %p99, %s100, %s101
      %p105 = pneg %p99
      %p106 = scmp.eq.s32.totalorder %s22, 1
      %p107 = por %p105, %p106
      %p108 = scmp.ne.s32.totalorder %s100, %s103
      %p109 = scmp.eq.s32.totalorder %s22, 0
      %p110 = por %p108, %p109
      %p111 = scmp.ne.s32.totalorder %s100, %s103
      %p112 = scmp.eq.s32.totalorder %s27, 1
      %p113 = por %p111, %p112
      %p114 = scmp.ne.s32.totalorder %s103, %s104
      %p115 = scmp.eq.s32.totalorder %s27, 0
      %p116 = por %p114, %p115
      %p117 = scmp.ne.s32.totalorder %s103, %s104
      %p118 = scmp.eq.s32.totalorder %s28, 1
      %p119 = por %p117, %p118
      %p121 = scmp.ne.s32.totalorder %s104, %s120
      %p122 = scmp.eq.s32.totalorder %s28, 0
      %p123 = por %p121, %p122
      %s124 = ssub.s32 %s29, %s41
      %p125 = scmp.eq.s32.totalorder %s124, 0
      %s127 = sadd.s32 %s126, 1
      %s128 = scalar_select %p125, %s126, %s127
      %p131 = pneg %p125
      %p132 = scmp.eq.s32.totalorder %s22, 1
      %p133 = por %p131, %p132
      %p134 = scmp.ne.s32.totalorder %s126, %s129
      %p135 = scmp.eq.s32.totalorder %s22, 0
      %p136 = por %p134, %p135
      %p137 = scmp.ne.s32.totalorder %s126, %s129
      %p138 = scmp.eq.s32.totalorder %s27, 1
      %p139 = por %p137, %p138
      %p140 = scmp.ne.s32.totalorder %s129, %s130
      %p141 = scmp.eq.s32.totalorder %s27, 0
      %p142 = por %p140, %p141
      %p143 = scmp.ne.s32.totalorder %s129, %s130
      %p144 = scmp.eq.s32.totalorder %s28, 1
      %p145 = por %p143, %p144
      %p147 = scmp.ne.s32.totalorder %s130, %s146
      %p148 = scmp.eq.s32.totalorder %s28, 0
      %p149 = por %p147, %p148
      %p150 = scmp.le.s32.totalorder 1, %s22
      %p151 = scmp.lt.s32.totalorder %s22, 3
      %p152 = pnand %p150, %p151
      %p153 = pneg %p152
      // Predicated region
      $region9: #{tpu_custom_call.1} parent=5 // pred_check
        _
      $region10: #{tpu_custom_call.1} parent=5 // pred_check_branch
        %155 = sbr.rel (%p152) target = $region12
      $region11: #{tpu_custom_call.1} parent=5 // pred_region
        %s156 = ssub.s32 %s22, 1
      $region12: #{tpu_custom_call.1} parent=5 // pred_fallthru
        _
      %p157 = scmp.lt.s32.totalorder %s22, 2
      // Predicated region
      $region13: #{tpu_custom_call.1} parent=5 // pred_check
        %p158 = pneg %p157
      $region14: #{tpu_custom_call.1} parent=5 // pred_check_branch
        %160 = sbr.rel (%p158) target = $region16
      $region15: #{tpu_custom_call.1} parent=5 // pred_region
        // Predicated region
        $region17: #{tpu_custom_call.1} parent=15 // pred_check
          %p161 = pneg %p56
        $region18: #{tpu_custom_call.1} parent=15 // pred_check_branch
          %163 = sbr.rel (%p161) target = $region20
        $region19: #{tpu_custom_call.1} parent=15 // pred_region
          %s164 = sand.u32 %s46, 1
          %s165 = scalar_lea.sflag [#allocation3], %s164
          %s166 = sand.u32 %s46, 1
          %s167 = smul.addr %s166, 8
          %s168 = scalar_lea.vmem [#allocation2], %s167
          %s170 = ssub.s32 128, 128
          %171 = vsyncadd %s165, %s170
          %s172 = smul.addr %s29, 4
          %s173 = sadd.s32 %s30, %s172
          %s174 = smul.addr %s173, 32
          %s175 = scalar_lea.hbm %s0, %s174
          %s176 = sshll.u32 %s168, 4
          %s177 = int_to_ptr.vmem [resolvable:$true] %s176
          %182 = dma.hbm_to_vmem [thread:$0]  %s175, 128, %s177, %s165, 32, 32, 2
        $region20: #{tpu_custom_call.1} parent=15 // pred_fallthru
          _
        // Predicated region
        $region21: #{tpu_custom_call.1} parent=15 // pred_check
          %p183 = pneg %p84
        $region22: #{tpu_custom_call.1} parent=15 // pred_check_branch
          %185 = sbr.rel (%p183) target = $region24
        $region23: #{tpu_custom_call.1} parent=15 // pred_region
          %s186 = sand.u32 %s74, 1
          %s187 = scalar_lea.sflag [#allocation6], %s186
          %s188 = sand.u32 %s74, 1
          %s189 = smul.addr %s188, 2
          %s190 = scalar_lea.vmem [#allocation5], %s189
          %s192 = ssub.s32 32, 32
          %193 = vsyncadd %s187, %s192
          %s194 = sadd.s32 %s30, %s29
          %s195 = smul.addr %s194, 32
          %s196 = scalar_lea.hbm %s1, %s195
          %s198 = sshll.u32 %s190, 4
          %s199 = int_to_ptr.vmem [resolvable:$true] %s198
          %201 = dma.hbm_to_vmem [thread:$0]  %s196, 32, %s199, %s187
        $region24: #{tpu_custom_call.1} parent=15 // pred_fallthru
          _
      $region16: #{tpu_custom_call.1} parent=5 // pred_fallthru
        _
      %p202 = scmp.le.s32.totalorder 1, %s22
      %p203 = scmp.lt.s32.totalorder %s22, 3
      %p204 = pnand %p202, %p203
      %p205 = pneg %p204
      // Predicated region
      $region25: #{tpu_custom_call.1} parent=5 // pred_check
        _
      $region26: #{tpu_custom_call.1} parent=5 // pred_check_branch
        %207 = sbr.rel (%p204) target = $region28
      $region27: #{tpu_custom_call.1} parent=5 // pred_region
        %s208 = ssub.s32 %s22, 1
        %s209 = sand.u32 %s49, 1
        %s210 = scalar_lea.sflag [#allocation3], %s209
        %s211 = sand.u32 %s49, 1
        %s212 = smul.addr %s211, 8
        %s213 = scalar_lea.vmem [#allocation2], %s212
        // Predicated region
        $region29: #{tpu_custom_call.1} parent=27 // pred_check
          %p214 = pneg %p62
        $region30: #{tpu_custom_call.1} parent=27 // pred_check_branch
          %216 = sbr.rel (%p214) target = $region32
        $region31: #{tpu_custom_call.1} parent=27 // pred_region
          %217 = dma.done %s210, 128
        $region32: #{tpu_custom_call.1} parent=27 // pred_fallthru
          _
        %s218 = sand.u32 %s77, 1
        %s219 = scalar_lea.sflag [#allocation6], %s218
        %s220 = sand.u32 %s77, 1
        %s221 = smul.addr %s220, 2
        %s222 = scalar_lea.vmem [#allocation5], %s221
        // Predicated region
        $region33: #{tpu_custom_call.1} parent=27 // pred_check
          %p223 = pneg %p90
        $region34: #{tpu_custom_call.1} parent=27 // pred_check_branch
          %225 = sbr.rel (%p223) target = $region36
        $region35: #{tpu_custom_call.1} parent=27 // pred_region
          %226 = dma.done %s219, 32
        $region36: #{tpu_custom_call.1} parent=27 // pred_fallthru
          _
        %s227 = sand.u32 %s49, 1
        %s228 = scalar_lea.sflag [#allocation3], %s227
        %s229 = sand.u32 %s49, 1
        %s230 = smul.addr %s229, 8
        %s231 = scalar_lea.vmem [#allocation2], %s230
        %p232 = pneg %p62
        %p233 = pneg %p59
        %s234 = sand.u32 %s77, 1
        %s235 = scalar_lea.sflag [#allocation6], %s234
        %s236 = sand.u32 %s77, 1
        %s237 = smul.addr %s236, 2
        %s238 = scalar_lea.vmem [#allocation5], %s237
        %p239 = pneg %p90
        %p240 = pneg %p87
        %p241 = pneg %p116
        %p242 = pneg %p113
        %s243 = sand.u32 %s103, 1
        %s244 = scalar_lea.sflag [#allocation4], %s243
        %s245 = sand.u32 %s103, 1
        %s246 = smul.addr %s245, 4
        %s247 = scalar_lea.vmem [#allocation7], %s246
        %p248 = pneg %p142
        %p249 = pneg %p139
        %s250 = sand.u32 %s129, 1
        %s251 = scalar_lea.sflag [#allocation9], %s250
        %s252 = sand.u32 %s129, 1
        %s253 = smul.addr %s252, 4
        %s254 = scalar_lea.vmem [#allocation8], %s253
        %p255 = scmp.eq.s32.totalorder %s32, 0
        // Predicated region
        $region37: #{tpu_custom_call.1} parent=27 // pred_check
          %p256 = pneg %p255
        $region38: #{tpu_custom_call.1} parent=27 // pred_check_branch
          %258 = sbr.rel (%p256) target = $region40
        $region39: #{tpu_custom_call.1} parent=27 // pred_region
          %259 = vst [vmem:[%s247] sm:$0xf] 0.0
          %260 = vst [vmem:[%s254] sm:$0xf] 0.0
        $region40: #{tpu_custom_call.1} parent=27 // pred_fallthru
          _
        %v261 = vld [vmem:[%s213] sm:$0x3]
        %v262 = vld [vmem:[%s213 + $0x2] sm:$0x3]
        %v263 = vld [vmem:[%s213 + $0x4] sm:$0x3]
        %v264 = vld [vmem:[%s213 + $0x6] sm:$0x3]
        %v265 = vld [vmem:[%s222] sm:$0x3]
        %vm266 = vcmask 1041408
        %v267 = vsel %vm266, %v261, -inf
        %v268 = vsel %vm266, %v262, -inf
        %v269 = vsel %vm266, %v263, -inf
        %v270 = vsel %vm266, %v264, -inf
        %v271 = vmax.f32 %v267, %v268
        %v272 = vmax.f32 %v269, %v270
        %v273 = vmax.f32 %v271, %v272
        %v274 = vsub.f32 %v261, %v273
        %v275 = vsub.f32 %v262, %v273
        %v276 = vsub.f32 %v263, %v273
        %v277 = vsub.f32 %v264, %v273
        %v278 = vmul.f32 %v274, 1.442695
        %v279 = vpow.pop %v278
        %v280 = vmul.f32 %v275, 1.442695
        %v281 = vpow.pop %v280
        %v282 = vmul.f32 %v276, 1.442695
        %v283 = vpow.pop %v282
        %v284 = vmul.f32 %v277, 1.442695
        %v285 = vpow.pop %v284
        %v286 = vsel %vm266, %v279, 0.0
        %v287 = vsel %vm266, %v281, 0.0
        %v288 = vadd.f32 %v286, %v287
        %v289 = vsel %vm266, %v283, 0.0
        %v290 = vadd.f32 %v288, %v289
        %v291 = vsel %vm266, %v285, 0.0
        %v292 = vadd.f32 %v290, %v291
        %v293 = vrcp.pop %v292
        %v294 = vmul.f32 %v279, %v293
        %v295 = vmul.f32 %v281, %v293
        %v296 = vmul.f32 %v283, %v293
        %v297 = vmul.f32 %v285, %v293
        %v298 = vlaneseq
        %v299 = vshrl.u32 %v298, 7
        %v300 = vlaneseq
        %v301 = vand.u32 %v300, 127
        %s302 = smul.u32 %s32, 2
        %v303 = vstv %s302
        %v304 = vadd.s32 %v303, %v299
        %v305 = vmul.u32 %v304, 128
        %v306 = vadd.s32 %v305, %v301
        %vm307 = vcmp.lt.s32.totalorder %v306, 256
        %vm308 = vcmp.eq.s32.totalorder %v265, 0
        %vm309 = vcmp.eq.s32.totalorder %v265, 1
        %vm310 = vcmp.eq.s32.totalorder %v265, 2
        %vm311 = vcmp.eq.s32.totalorder %v265, 3
        %v312 = vsel %vm307, 1, 0
        %vm313 = vcmp.eq.s32.totalorder %v312, 1
        %vm314 = vmand %vm308, %vm313
        %vm315 = vmand %vm309, %vm313
        %vm316 = vmand %vm310, %vm313
        %vm317 = vmand %vm311, %vm313
        %v318 = vsel %vm313, %v294, 0.0
        %v319 = vsel %vm313, %v295, 0.0
        %v320 = vsel %vm313, %v296, 0.0
        %v321 = vsel %vm313, %v297, 0.0
        %v322 = vsel %vm314, %v294, 0.0
        %v323 = vsel %vm315, %v295, 0.0
        %v324 = vsel %vm316, %v296, 0.0
        %v325 = vsel %vm317, %v297, 0.0
        %v326 = vsel %vm314, 1.0, %v318
        %v327 = vsel %vm315, 1.0, %v319
        %v328 = vsel %vm316, 1.0, %v320
        %v329 = vsel %vm317, 1.0, %v321
        %v330 = vld [vmem:[%s247] sm:$0xf]
        %v331 = vsel %vm266, %v322, 0.0
        %v332 = vrot.slane %v331, 4
        %v333 = vadd.f32 %v331, %v332
        %v334 = vrot.slane %v333, 2
        %v335 = vadd.f32 %v333, %v334
        %v336 = vrot.slane %v335, 1
        %v337 = vadd.f32 %v335, %v336
        %v338 = vsel %vm266, %v323, 0.0
        %v339 = vrot.slane %v338, 4
        %v340 = vadd.f32 %v338, %v339
        %v341 = vrot.slane %v340, 2
        %v342 = vadd.f32 %v340, %v341
        %v343 = vrot.slane %v342, 1
        %v344 = vadd.f32 %v342, %v343
        %v345 = vsel %vm266, %v324, 0.0
        %v346 = vrot.slane %v345, 4
        %v347 = vadd.f32 %v345, %v346
        %v348 = vrot.slane %v347, 2
        %v349 = vadd.f32 %v347, %v348
        %v350 = vrot.slane %v349, 1
        %v351 = vadd.f32 %v349, %v350
        %v352 = vsel %vm266, %v325, 0.0
        %v353 = vrot.slane %v352, 4
        %v354 = vadd.f32 %v352, %v353
        %v355 = vrot.slane %v354, 2
        %v356 = vadd.f32 %v354, %v355
        %v357 = vrot.slane %v356, 1
        %v358 = vadd.f32 %v356, %v357
        %vm363 = vcmask 1041409
        %v364 = vsel %vm363, %v344, %v337
        %vm365 = vcmask 1042434
        %v366 = vsel %vm365, %v351, %v364
        %vm367 = vcmask 1043459
        %v368 = vsel %vm367, %v358, %v366
        %v370 = vadd.f32 %v330, %v368
        %371 = vst [vmem:[%s247] sm:$0xf] %v370
        %v372 = vld [vmem:[%s254] sm:$0xf]
        %v373 = vsel %vm266, %v326, 0.0
        %v374 = vrot.slane %v373, 4
        %v375 = vadd.f32 %v373, %v374
        %v376 = vrot.slane %v375, 2
        %v377 = vadd.f32 %v375, %v376
        %v378 = vrot.slane %v377, 1
        %v379 = vadd.f32 %v377, %v378
        %v380 = vsel %vm266, %v327, 0.0
        %v381 = vrot.slane %v380, 4
        %v382 = vadd.f32 %v380, %v381
        %v383 = vrot.slane %v382, 2
        %v384 = vadd.f32 %v382, %v383
        %v385 = vrot.slane %v384, 1
        %v386 = vadd.f32 %v384, %v385
        %v387 = vsel %vm266, %v328, 0.0
        %v388 = vrot.slane %v387, 4
        %v389 = vadd.f32 %v387, %v388
        %v390 = vrot.slane %v389, 2
        %v391 = vadd.f32 %v389, %v390
        %v392 = vrot.slane %v391, 1
        %v393 = vadd.f32 %v391, %v392
        %v394 = vsel %vm266, %v329, 0.0
        %v395 = vrot.slane %v394, 4
        %v396 = vadd.f32 %v394, %v395
        %v397 = vrot.slane %v396, 2
        %v398 = vadd.f32 %v396, %v397
        %v399 = vrot.slane %v398, 1
        %v400 = vadd.f32 %v398, %v399
        %v405 = vsel %vm363, %v386, %v379
        %v406 = vsel %vm365, %v393, %v405
        %v407 = vsel %vm367, %v400, %v406
        %v409 = vadd.f32 %v372, %v407
        %410 = vst [vmem:[%s254] sm:$0xf] %v409
        %s411 = sand.u32 %s103, 1
        %s412 = scalar_lea.sflag [#allocation4], %s411
        %s413 = sand.u32 %s103, 1
        %s414 = smul.addr %s413, 4
        %s415 = scalar_lea.vmem [#allocation7], %s414
        %s416 = sand.u32 %s129, 1
        %s417 = scalar_lea.sflag [#allocation9], %s416
        %s418 = sand.u32 %s129, 1
        %s419 = smul.addr %s418, 4
        %s420 = scalar_lea.vmem [#allocation8], %s419
        // Predicated region
        $region41: #{tpu_custom_call.1} parent=27 // pred_check
          %p421 = pneg %p113
        $region42: #{tpu_custom_call.1} parent=27 // pred_check_branch
          %423 = sbr.rel (%p421) target = $region44
        $region43: #{tpu_custom_call.1} parent=27 // pred_region
          %s425 = ssub.s32 64, 64
          %426 = vsyncadd %s412, %s425
          %s427 = smul.addr %s31, 64
          %s428 = scalar_lea.hbm %s2, %s427
          %s430 = sshll.u32 %s415, 4
          %s431 = int_to_ptr.vmem [resolvable:$true] %s430
          %433 = dma.vmem_to_hbm [thread:$0]  %s431, 64, %s428, %s412
        $region44: #{tpu_custom_call.1} parent=27 // pred_fallthru
          _
        // Predicated region
        $region45: #{tpu_custom_call.1} parent=27 // pred_check
          %p434 = pneg %p139
        $region46: #{tpu_custom_call.1} parent=27 // pred_check_branch
          %436 = sbr.rel (%p434) target = $region48
        $region47: #{tpu_custom_call.1} parent=27 // pred_region
          %s438 = ssub.s32 64, 64
          %439 = vsyncadd %s417, %s438
          %s440 = smul.addr %s31, 64
          %s441 = scalar_lea.hbm %s3, %s440
          %s443 = sshll.u32 %s420, 4
          %s444 = int_to_ptr.vmem [resolvable:$true] %s443
          %446 = dma.vmem_to_hbm [thread:$0]  %s444, 64, %s441, %s417
        $region48: #{tpu_custom_call.1} parent=27 // pred_fallthru
          _
      $region28: #{tpu_custom_call.1} parent=5 // pred_fallthru
        _
      %p447 = scmp.le.s32.totalorder 2, %s22
      // Predicated region
      $region49: #{tpu_custom_call.1} parent=5 // pred_check
        %p448 = pneg %p447
      $region50: #{tpu_custom_call.1} parent=5 // pred_check_branch
        %450 = sbr.rel (%p448) target = $region52
      $region51: #{tpu_custom_call.1} parent=5 // pred_region
        %s451 = ssub.s32 %s22, 2
        // Predicated region
        $region53: #{tpu_custom_call.1} parent=51 // pred_check
          %p452 = pneg %p119
        $region54: #{tpu_custom_call.1} parent=51 // pred_check_branch
          %454 = sbr.rel (%p452) target = $region56
        $region55: #{tpu_custom_call.1} parent=51 // pred_region
          %s455 = sand.u32 %s104, 1
          %s456 = scalar_lea.sflag [#allocation4], %s455
          %s457 = sand.u32 %s104, 1
          %s458 = smul.addr %s457, 4
          %s459 = scalar_lea.vmem [#allocation7], %s458
          %460 = dma.done %s456, 64
        $region56: #{tpu_custom_call.1} parent=51 // pred_fallthru
          _
        // Predicated region
        $region57: #{tpu_custom_call.1} parent=51 // pred_check
          %p461 = pneg %p145
        $region58: #{tpu_custom_call.1} parent=51 // pred_check_branch
          %463 = sbr.rel (%p461) target = $region60
        $region59: #{tpu_custom_call.1} parent=51 // pred_region
          %s464 = sand.u32 %s130, 1
          %s465 = scalar_lea.sflag [#allocation9], %s464
          %s466 = sand.u32 %s130, 1
          %s467 = smul.addr %s466, 4
          %s468 = scalar_lea.vmem [#allocation8], %s467
          %469 = dma.done %s465, 64
        $region60: #{tpu_custom_call.1} parent=51 // pred_fallthru
          _
      $region52: #{tpu_custom_call.1} parent=5 // pred_fallthru
        _
    $region6: #{tpu_custom_call.1} parent=1 // loop_footer
      %s26 = sadd.s32 1, %s22
    $region7: #{tpu_custom_call.1} parent=1 // loop_footer_branch
      %21 = sbr.rel target = $region3
    $region8: #{tpu_custom_call.1} parent=1 // loop_exit
      _
    %470 = vsyncpa [#allocation3], 1
    %s471 = scalar_lea.sflag [#allocation3], 1
    %472 = vsyncpa %s471, 1
    %473 = vsyncpa [#allocation6], 1
    %s474 = scalar_lea.sflag [#allocation6], 1
    %475 = vsyncpa %s474, 1
    %476 = vsyncpa [#allocation4], 1
    %s477 = scalar_lea.sflag [#allocation4], 1
    %478 = vsyncpa %s477, 1
    %479 = vsyncpa [#allocation9], 1
    %s480 = scalar_lea.sflag [#allocation9], 1
    %481 = vsyncpa %s480, 1

</llo_original>
